<compile_context>
chip_gen: v7x
topology: tpu7x:2x2x1
jax: 0.10.0
libtpu: 0.0.40
codegen_flags: <defaults>
</compile_context>

<pallas_src>
import functools

import jax
import jax.numpy as jnp
from jax.experimental import pallas as pl
from jax.experimental.pallas import tpu as pltpu


def _round_up(x, m):
    return (x + m - 1) // m * m


def glvq_kernel(x_ref, p_ref, w_ref, b_ref, o_ref, *, num_protos, c_pad, mxu_dtype):
    """Per batch tile: min-over-protos L2 distance to encoded prototypes.

    x_ref : (TB, D)            query-feature batch tile
    p_ref : (NP * C_pad, Din)  proto table, class axis zero-padded to C_pad
    w_ref : (Din, D)           encoder weight (Linear)
    b_ref : (1, D)             encoder bias
    o_ref : (TB, C_pad)        per-class min distance (cols >= num_classes are junk)
    """
    x = x_ref[...].astype(jnp.float32)                            # (TB, D)
    w = w_ref[...]
    b = b_ref[...]
    p = p_ref[...]

    # Encoder: one matmul over the whole (padded) proto table.
    ep = jnp.dot(p.astype(mxu_dtype), w.astype(mxu_dtype),
                 preferred_element_type=jnp.float32) + b          # (NPC, D) f32

    # Squared-distance decomposition: d2 = ||x||^2 + ||ep||^2 - 2 * x.ep
    x_sq = jnp.sum(x * x, axis=-1, keepdims=True)                 # (TB, 1)
    p_sq = jnp.sum(ep * ep, axis=-1)[None, :]                     # (1, NPC)
    cross = jax.lax.dot_general(                                  # x @ ep.T -> (TB, NPC)
        x.astype(mxu_dtype), ep.astype(mxu_dtype),
        dimension_numbers=(((1,), (1,)), ((), ())),
        preferred_element_type=jnp.float32)
    d2 = x_sq + p_sq - 2.0 * cross                                # (TB, NPC)

    # Min over protos: static, lane-aligned slices of width C_pad (mult. of 128).
    m = d2[:, :c_pad]
    for k in range(1, num_protos):
        m = jnp.minimum(m, d2[:, k * c_pad:(k + 1) * c_pad])

    # sqrt only after the min; clamp tiny negatives from cancellation.
    o_ref[...] = jnp.sqrt(jnp.maximum(m, 0.0))


def glvq_forward(x, protos, enc_w, enc_b, *, num_protos, num_classes,
                 tile_b=256, use_bf16_mxu=False):
    B, D = x.shape
    nall, d_in = protos.shape
    assert nall == num_protos * num_classes
    w_in, w_out = enc_w.shape
    assert w_in == d_in and w_out == D

    # Pad the class axis to a multiple of 128: lane-aligned min slices and a
    # lane-dense output store. Dummy proto rows are zeros; their distances land
    # in output columns >= num_classes and are sliced away below.
    c_pad = _round_up(num_classes, 128)
    npc = num_protos * c_pad
    p3 = protos.reshape(num_protos, num_classes, d_in).astype(jnp.float32)
    p_pad = jnp.zeros((num_protos, c_pad, d_in), jnp.float32)
    p_pad = p_pad.at[:, :num_classes, :].set(p3)
    p2 = p_pad.reshape(npc, d_in)

    # Batch tiling (sublane-aligned); pad B up to a multiple of the tile.
    tb = _round_up(min(tile_b, _round_up(B, 8)), 8)
    b_pad = _round_up(B, tb)
    x_p = x.astype(jnp.float32)
    if b_pad != B:
        x_p = jnp.zeros((b_pad, D), jnp.float32).at[:B].set(x_p)

    mxu_dtype = jnp.bfloat16 if use_bf16_mxu else jnp.float32
    kernel = functools.partial(glvq_kernel, num_protos=num_protos,
                               c_pad=c_pad, mxu_dtype=mxu_dtype)

    fsize = 4  # f32 bytes
    # VMEM budget: double-buffered x/out tiles + resident protos/W/b (+ headroom).
    # Sized conservatively so it fits v7x's 64 MiB physical VMEM.
    vmem_est = (2 * tb * D + 2 * tb * c_pad + 2 * npc * d_in
                + 2 * d_in * D + 2 * D) * fsize
    vmem_limit = int(min(vmem_est * 2 + (4 << 20), 48 << 20))

    cost = pl.CostEstimate(
        flops=2 * npc * d_in * D + 2 * b_pad * D * npc + 4 * b_pad * npc,
        transcendentals=b_pad * c_pad,
        bytes_accessed=(b_pad * D + npc * d_in + d_in * D + D + b_pad * c_pad) * fsize,
    )

    out = pl.pallas_call(
        kernel,
        out_shape=jax.ShapeDtypeStruct((b_pad, c_pad), jnp.float32),
        grid=(b_pad // tb,),
        in_specs=[
            pl.BlockSpec((tb, D), lambda i: (i, 0)),       # x: streamed batch tiles
            pl.BlockSpec((npc, d_in), lambda i: (0, 0)),   # protos: VMEM-resident
            pl.BlockSpec((d_in, D), lambda i: (0, 0)),     # encoder W: resident
            pl.BlockSpec((1, D), lambda i: (0, 0)),        # encoder b: resident
        ],
        out_specs=pl.BlockSpec((tb, c_pad), lambda i: (i, 0)),
        compiler_params=pltpu.CompilerParams(
            dimension_semantics=("parallel",),
            vmem_limit_bytes=vmem_limit,
        ),
        cost_estimate=cost,
    )(x_p, p2, enc_w.astype(jnp.float32), enc_b.reshape(1, -1).astype(jnp.float32))

    return out[:B, :num_classes]


def glvq_reference(x, protos, enc_w, enc_b, *, num_protos, num_classes):
    """Pure-JAX transcription of the PyTorch forward, for validation."""
    encoded = protos @ enc_w + enc_b                    # encoder(self.protos)
    diff = x[:, None, :] - encoded[None, :, :]          # (B, NALL, D)
    diff = jnp.linalg.norm(diff, ord=2, axis=-1)        # (B, NALL)
    diff = diff.reshape(x.shape[0], num_protos, num_classes)
    return jnp.min(diff, axis=1)                        # (B, C)


if __name__ == "__main__":
    num_classes = 5
    num_protos = 3
    feat_dim = 32
    batch = 4
    n_data = 20
    nall = num_protos * num_classes

    key = jax.random.PRNGKey(0)
    k_data, k_x, k_w, k_b = jax.random.split(key, 4)

    # __init__: protos = mean(data, dim=0) repeated NALL times (deterministic).
    data = jax.random.normal(k_data, (n_data, feat_dim), dtype=jnp.float32)
    protos = jnp.tile(jnp.mean(data, axis=0)[None, :], (nall, 1))   # (NALL, D)

    # Deterministic "encoder": a single Linear(feat_dim -> feat_dim).
    # TODO(synk): the PyTorch forward accepts an arbitrary encoder module; here it
    # is modeled as a single in-kernel Linear layer.
    enc_w = jax.random.normal(k_w, (feat_dim, feat_dim), dtype=jnp.float32) * 0.1
    enc_b = jax.random.normal(k_b, (feat_dim,), dtype=jnp.float32) * 0.1

    # Query features (already encoded, as in the PyTorch forward's `x`).
    x = jax.random.normal(k_x, (batch, feat_dim), dtype=jnp.float32)

    ref = glvq_reference(x, protos, enc_w, enc_b,
                         num_protos=num_protos, num_classes=num_classes)

    # f32 MXU path: tight tolerance.
    out = glvq_forward(x, protos, enc_w, enc_b,
                       num_protos=num_protos, num_classes=num_classes,
                       use_bf16_mxu=False)
    out = jax.block_until_ready(out)
    assert out.shape == (batch, num_classes)
    assert jnp.allclose(out, ref, atol=1e-4, rtol=1e-4), (out, ref)

    # bf16-input / f32-accumulate MXU path (v6e/v7x fast path): looser tolerance.
    out_bf16 = glvq_forward(x, protos, enc_w, enc_b,
                            num_protos=num_protos, num_classes=num_classes,
                            use_bf16_mxu=True)
    out_bf16 = jax.block_until_ready(out_bf16)
    assert out_bf16.shape == (batch, num_classes)
    assert jnp.allclose(out_bf16, ref, atol=5e-2, rtol=5e-2), (out_bf16, ref)

    print("KERNEL_OK")
</pallas_src>

<mosaic_0001>
module attributes {stable_mosaic.version = 11 : i64} {
  func.func @glvq_kernel(%arg0: i32, %arg1: memref<8x32xf32, #tpu.memory_space<vmem>>, %arg2: memref<384x32xf32, #tpu.memory_space<vmem>>, %arg3: memref<32x32xf32, #tpu.memory_space<vmem>>, %arg4: memref<1x32xf32, #tpu.memory_space<vmem>>, %arg5: memref<8x128xf32, #tpu.memory_space<vmem>>) attributes {dimension_semantics = [#tpu.dimension_semantics<parallel>], iteration_bounds = array<i64: 1>, scalar_prefetch = 0 : i64, scratch_operands = 0 : i64, tpu.core_type = #tpu.core_type<tc>, window_params = [{transform_indices = @transform_0, window_bounds = array<i64: 8, 32>}, {pipeline_mode = #tpu.pipeline_mode<synchronous>, transform_indices = @transform_1, window_bounds = array<i64: 384, 32>}, {pipeline_mode = #tpu.pipeline_mode<synchronous>, transform_indices = @transform_2, window_bounds = array<i64: 32, 32>}, {pipeline_mode = #tpu.pipeline_mode<synchronous>, transform_indices = @transform_3, window_bounds = array<i64: 1, 32>}, {transform_indices = @transform_4, window_bounds = array<i64: 8, 128>}]} {
    %c0 = arith.constant 0 : index
    %c0_0 = arith.constant 0 : index
    %0 = vector.load %arg1[%c0, %c0_0] : memref<8x32xf32, #tpu.memory_space<vmem>>, vector<8x32xf32>
    %c0_1 = arith.constant 0 : index
    %c0_2 = arith.constant 0 : index
    %1 = vector.load %arg3[%c0_1, %c0_2] : memref<32x32xf32, #tpu.memory_space<vmem>>, vector<32x32xf32>
    %c0_3 = arith.constant 0 : index
    %c0_4 = arith.constant 0 : index
    %2 = vector.load %arg4[%c0_3, %c0_4] : memref<1x32xf32, #tpu.memory_space<vmem>>, vector<1x32xf32>
    %c0_5 = arith.constant 0 : index
    %c0_6 = arith.constant 0 : index
    %3 = vector.load %arg2[%c0_5, %c0_6] : memref<384x32xf32, #tpu.memory_space<vmem>>, vector<384x32xf32>
    %cst = arith.constant dense<0.000000e+00> : vector<384x32xf32>
    %4 = tpu.matmul %3, %1, %cst {dimension_numbers = #tpu.dot_dimension_numbers<[1], [0], [0], [1], [0, 0, 1, 1], [], []>} : vector<384x32xf32>, vector<32x32xf32>, vector<384x32xf32> -> vector<384x32xf32>
    %5 = vector.broadcast %2 : vector<1x32xf32> to vector<384x32xf32>
    %6 = arith.addf %4, %5 : vector<384x32xf32>
    %7 = arith.mulf %0, %0 : vector<8x32xf32>
    %cst_7 = arith.constant dense<0.000000e+00> : vector<8xf32>
    %8 = vector.multi_reduction <add>, %7, %cst_7 [1] : vector<8x32xf32> to vector<8xf32>
    %9 = vector.shape_cast %8 : vector<8xf32> to vector<8x1xf32>
    %10 = arith.mulf %6, %6 : vector<384x32xf32>
    %cst_8 = arith.constant dense<0.000000e+00> : vector<384xf32>
    %11 = vector.multi_reduction <add>, %10, %cst_8 [1] : vector<384x32xf32> to vector<384xf32>
    %12 = vector.shape_cast %11 : vector<384xf32> to vector<1x384xf32>
    %cst_9 = arith.constant dense<0.000000e+00> : vector<8x384xf32>
    %13 = tpu.matmul %0, %6, %cst_9 {dimension_numbers = #tpu.dot_dimension_numbers<[1], [1], [0], [0], [0, 0, 1, 0], [], []>} : vector<8x32xf32>, vector<384x32xf32>, vector<8x384xf32> -> vector<8x384xf32>
    %14 = vector.broadcast %9 : vector<8x1xf32> to vector<8x384xf32>
    %15 = vector.broadcast %12 : vector<1x384xf32> to vector<8x384xf32>
    %16 = arith.addf %14, %15 : vector<8x384xf32>
    %cst_10 = arith.constant 2.000000e+00 : f32
    %17 = vector.broadcast %cst_10 : f32 to vector<8x384xf32>
    %18 = arith.mulf %17, %13 : vector<8x384xf32>
    %19 = arith.subf %16, %18 : vector<8x384xf32>
    %20 = vector.extract_strided_slice %19 {offsets = [0, 0], sizes = [8, 128], strides = [1, 1]} : vector<8x384xf32> to vector<8x128xf32>
    %21 = vector.extract_strided_slice %19 {offsets = [0, 128], sizes = [8, 128], strides = [1, 1]} : vector<8x384xf32> to vector<8x128xf32>
    %22 = arith.minimumf %20, %21 : vector<8x128xf32>
    %23 = vector.extract_strided_slice %19 {offsets = [0, 256], sizes = [8, 128], strides = [1, 1]} : vector<8x384xf32> to vector<8x128xf32>
    %24 = arith.minimumf %22, %23 : vector<8x128xf32>
    %cst_11 = arith.constant 0.000000e+00 : f32
    %25 = vector.broadcast %cst_11 : f32 to vector<8x128xf32>
    %26 = arith.maximumf %24, %25 : vector<8x128xf32>
    %27 = math.sqrt %26 : vector<8x128xf32>
    %c0_12 = arith.constant 0 : index
    %c0_13 = arith.constant 0 : index
    %28 = vector.load %arg5[%c0_12, %c0_13] : memref<8x128xf32, #tpu.memory_space<vmem>>, vector<8x128xf32>
    tpu.vector_store %arg5[%c0_12, %c0_13], %27 {strides = array<i32>} : memref<8x128xf32, #tpu.memory_space<vmem>>, vector<8x128xf32>,
    return
  }
  func.func @transform_0(%arg0: i32) -> (i32, i32) {
    %c0_i32 = arith.constant 0 : i32
    %c0_i32_0 = arith.constant 0 : i32
    return %arg0, %c0_i32 : i32, i32
  }
  func.func @transform_1(%arg0: i32) -> (i32, i32) {
    %c0_i32 = arith.constant 0 : i32
    %c0_i32_0 = arith.constant 0 : i32
    %c0_i32_1 = arith.constant 0 : i32
    return %c0_i32, %c0_i32_0 : i32, i32
  }
  func.func @transform_2(%arg0: i32) -> (i32, i32) {
    %c0_i32 = arith.constant 0 : i32
    %c0_i32_0 = arith.constant 0 : i32
    %c0_i32_1 = arith.constant 0 : i32
    return %c0_i32, %c0_i32_0 : i32, i32
  }
  func.func @transform_3(%arg0: i32) -> (i32, i32) {
    %c0_i32 = arith.constant 0 : i32
    %c0_i32_0 = arith.constant 0 : i32
    %c0_i32_1 = arith.constant 0 : i32
    return %c0_i32, %c0_i32_0 : i32, i32
  }
  func.func @transform_4(%arg0: i32) -> (i32, i32) {
    %c0_i32 = arith.constant 0 : i32
    %c0_i32_0 = arith.constant 0 : i32
    return %arg0, %c0_i32 : i32, i32
  }
}

</mosaic_0001>

<llo_original>
// kernel: tpu_custom_call.1
$region0: #{tpu_custom_call.1}
  #allocation0 [shape = 'u32[]', space=smem, size = 0x4, offset = 0x4, fixed_abs, tag = 'smem constant byte address 0x4 - core index']
  #allocation1 [shape = 'u32[144,128]{1,0:T(1,128)}', space=vmem, size = 0x12000, scoped, tag = 'internal scratch']
  %s0 = inlined_call_operand.vmem [shape: f32[8,32], index: 0, kind: input, shape index: {}]
  %s1 = inlined_call_operand.vmem [shape: f32[384,32], index: 1, kind: input, shape index: {}]
  %s2 = inlined_call_operand.vmem [shape: f32[32,32], index: 2, kind: input, shape index: {}]
  %s3 = inlined_call_operand.vmem [shape: f32[1,32], index: 3, kind: input, shape index: {}]
  %s4 = inlined_call_operand.hbm [shape: f32[8,128], index: 4, kind: output, shape index: {}]
  %s5 = sld [smem:[#allocation0]]
  $region26: #{tpu_custom_call.1} parent=0
    _
  %s7 = ssub.s32 1, %s5
  %s8 = scalar_select 0, %s7, %s5
  $region1: #{tpu_custom_call.1} parent=0
    #allocation2 [shape = 'u8[4096]{0}', space=vmem, size = 0x1000, scoped, tag = 'output window, operand 0, single buffered']
    #allocation3 [shape = 's32[1]{0}', space=sflag, size = 0x4, scoped, tag = 'scoped memory for tpu_custom_call.1']
    %9 = vsyncpa [#allocation3], 0
    // Predicated region
    $region2: #{tpu_custom_call.1} parent=1 // pred_check
      _
    $region3: #{tpu_custom_call.1} parent=1 // pred_check_branch
      %11 = sbr.rel (0) target = $region5
    $region4: #{tpu_custom_call.1} parent=1 // pred_region
      _
    $region5: #{tpu_custom_call.1} parent=1 // pred_fallthru
      _
    // Predicated region
    $region6: #{tpu_custom_call.1} parent=1 // pred_check
      _
    $region7: #{tpu_custom_call.1} parent=1 // pred_check_branch
      %13 = sbr.rel (0) target = $region9
    $region8: #{tpu_custom_call.1} parent=1 // pred_region
      _
    $region9: #{tpu_custom_call.1} parent=1 // pred_fallthru
      _
    // Predicated region
    $region10: #{tpu_custom_call.1} parent=1 // pred_check
      _
    $region11: #{tpu_custom_call.1} parent=1 // pred_check_branch
      %15 = sbr.rel (0) target = $region13
    $region12: #{tpu_custom_call.1} parent=1 // pred_region
      _
    $region13: #{tpu_custom_call.1} parent=1 // pred_fallthru
      _
    // Predicated region
    $region14: #{tpu_custom_call.1} parent=1 // pred_check
      _
    $region15: #{tpu_custom_call.1} parent=1 // pred_check_branch
      %17 = sbr.rel (0) target = $region17
    $region16: #{tpu_custom_call.1} parent=1 // pred_region
      _
    $region17: #{tpu_custom_call.1} parent=1 // pred_fallthru
      _
    %v18 = vld [vmem:[%s0] sm:$0xff]
    %v19 = vld [vmem:[%s2] sm:$0xff]
    %v20 = vld [vmem:[%s2 + $0x8] sm:$0xff]
    %v21 = vld [vmem:[%s2 + $0x10] sm:$0xff]
    %v22 = vld [vmem:[%s2 + $0x18] sm:$0xff]
    %v23 = vld [vmem:[%s3] sm:$0x1]
    %v24 = vld [vmem:[%s1] sm:$0xff]
    %v25 = vld [vmem:[%s1 + $0x8] sm:$0xff]
    %v26 = vld [vmem:[%s1 + $0x10] sm:$0xff]
    %v27 = vld [vmem:[%s1 + $0x18] sm:$0xff]
    %v28 = vld [vmem:[%s1 + $0x20] sm:$0xff]
    %v29 = vld [vmem:[%s1 + $0x28] sm:$0xff]
    %v30 = vld [vmem:[%s1 + $0x30] sm:$0xff]
    %v31 = vld [vmem:[%s1 + $0x38] sm:$0xff]
    %v32 = vld [vmem:[%s1 + $0x40] sm:$0xff]
    %v33 = vld [vmem:[%s1 + $0x48] sm:$0xff]
    %v34 = vld [vmem:[%s1 + $0x50] sm:$0xff]
    %v35 = vld [vmem:[%s1 + $0x58] sm:$0xff]
    %v36 = vld [vmem:[%s1 + $0x60] sm:$0xff]
    %v37 = vld [vmem:[%s1 + $0x68] sm:$0xff]
    %v38 = vld [vmem:[%s1 + $0x70] sm:$0xff]
    %v39 = vld [vmem:[%s1 + $0x78] sm:$0xff]
    %v40 = vld [vmem:[%s1 + $0x80] sm:$0xff]
    %v41 = vld [vmem:[%s1 + $0x88] sm:$0xff]
    %v42 = vld [vmem:[%s1 + $0x90] sm:$0xff]
    %v43 = vld [vmem:[%s1 + $0x98] sm:$0xff]
    %v44 = vld [vmem:[%s1 + $0xa0] sm:$0xff]
    %v45 = vld [vmem:[%s1 + $0xa8] sm:$0xff]
    %v46 = vld [vmem:[%s1 + $0xb0] sm:$0xff]
    %v47 = vld [vmem:[%s1 + $0xb8] sm:$0xff]
    %v48 = vld [vmem:[%s1 + $0xc0] sm:$0xff]
    %v49 = vld [vmem:[%s1 + $0xc8] sm:$0xff]
    %v50 = vld [vmem:[%s1 + $0xd0] sm:$0xff]
    %v51 = vld [vmem:[%s1 + $0xd8] sm:$0xff]
    %v52 = vld [vmem:[%s1 + $0xe0] sm:$0xff]
    %v53 = vld [vmem:[%s1 + $0xe8] sm:$0xff]
    %v54 = vld [vmem:[%s1 + $0xf0] sm:$0xff]
    %v55 = vld [vmem:[%s1 + $0xf8] sm:$0xff]
    %v56 = vld [vmem:[%s1 + $0x100] sm:$0xff]
    %v57 = vld [vmem:[%s1 + $0x108] sm:$0xff]
    %v58 = vld [vmem:[%s1 + $0x110] sm:$0xff]
    %v59 = vld [vmem:[%s1 + $0x118] sm:$0xff]
    %v60 = vld [vmem:[%s1 + $0x120] sm:$0xff]
    %v61 = vld [vmem:[%s1 + $0x128] sm:$0xff]
    %v62 = vld [vmem:[%s1 + $0x130] sm:$0xff]
    %v63 = vld [vmem:[%s1 + $0x138] sm:$0xff]
    %v64 = vld [vmem:[%s1 + $0x140] sm:$0xff]
    %v65 = vld [vmem:[%s1 + $0x148] sm:$0xff]
    %v66 = vld [vmem:[%s1 + $0x150] sm:$0xff]
    %v67 = vld [vmem:[%s1 + $0x158] sm:$0xff]
    %v68 = vld [vmem:[%s1 + $0x160] sm:$0xff]
    %v69 = vld [vmem:[%s1 + $0x168] sm:$0xff]
    %v70 = vld [vmem:[%s1 + $0x170] sm:$0xff]
    %v71 = vld [vmem:[%s1 + $0x178] sm:$0xff]
    %v73 = vlaneseq
    %v74 = vshrl.u32 %v73, 7
    %v75 = vsub.s32 0, %v74
    %v76 = vrot.slane %v23, %v75
    %vm78 = vcmask 261120
    %v80 = vsel %vm78, %v24, 0
    %v83 = vsel %vm78, %v25, 0
    %v86 = vsel %vm78, %v26, 0
    %v89 = vsel %vm78, %v27, 0
    %v92 = vsel %vm78, %v28, 0
    %v95 = vsel %vm78, %v29, 0
    %v98 = vsel %vm78, %v30, 0
    %v101 = vsel %vm78, %v31, 0
    %v104 = vsel %vm78, %v32, 0
    %v107 = vsel %vm78, %v33, 0
    %v110 = vsel %vm78, %v34, 0
    %v113 = vsel %vm78, %v35, 0
    %v116 = vsel %vm78, %v36, 0
    %v119 = vsel %vm78, %v37, 0
    %v122 = vsel %vm78, %v38, 0
    %v125 = vsel %vm78, %v39, 0
    %v128 = vsel %vm78, %v40, 0
    %v131 = vsel %vm78, %v41, 0
    %v134 = vsel %vm78, %v42, 0
    %v137 = vsel %vm78, %v43, 0
    %v140 = vsel %vm78, %v44, 0
    %v143 = vsel %vm78, %v45, 0
    %v146 = vsel %vm78, %v46, 0
    %v149 = vsel %vm78, %v47, 0
    %v152 = vsel %vm78, %v48, 0
    %v155 = vsel %vm78, %v49, 0
    %v158 = vsel %vm78, %v50, 0
    %v161 = vsel %vm78, %v51, 0
    %v164 = vsel %vm78, %v52, 0
    %v167 = vsel %vm78, %v53, 0
    %v170 = vsel %vm78, %v54, 0
    %v173 = vsel %vm78, %v55, 0
    %v176 = vsel %vm78, %v56, 0
    %v179 = vsel %vm78, %v57, 0
    %v182 = vsel %vm78, %v58, 0
    %v185 = vsel %vm78, %v59, 0
    %v188 = vsel %vm78, %v60, 0
    %v191 = vsel %vm78, %v61, 0
    %v194 = vsel %vm78, %v62, 0
    %v197 = vsel %vm78, %v63, 0
    %v200 = vsel %vm78, %v64, 0
    %v203 = vsel %vm78, %v65, 0
    %v206 = vsel %vm78, %v66, 0
    %v209 = vsel %vm78, %v67, 0
    %v212 = vsel %vm78, %v68, 0
    %v215 = vsel %vm78, %v69, 0
    %v218 = vsel %vm78, %v70, 0
    %v221 = vsel %vm78, %v71, 0
    %223 = vmatprep.subr.mxu0 0.0
    %224 = vmatpush1.msra.mxu0 %v19
    %225 = vmatprep.subr.mxu0 0.0
    %226 = vmatpush1.msra.mxu0 %v20
    %227 = vmatprep.subr.mxu0 0.0
    %228 = vmatpush1.msra.mxu0 %v21
    %229 = vmatprep.subr.mxu0 0.0
    %230 = vmatpush1.msra.mxu0 %v22
    %231 = vmatprep.subr.mxu0 0.0
    %232 = vmatpush1.msra.mxu0 0.0
    %233 = vmatprep.subr.mxu0 0.0
    %234 = vmatpush1.msra.mxu0 0.0
    %235 = vmatprep.subr.mxu0 0.0
    %236 = vmatpush1.msra.mxu0 0.0
    %237 = vmatprep.subr.mxu0 0.0
    %238 = vmatpush1.msra.mxu0 0.0
    %239 = vmatprep.subr.mxu0 0.0
    %240 = vmatpush1.msra.mxu0 0.0
    %241 = vmatprep.subr.mxu0 0.0
    %242 = vmatpush1.msra.mxu0 0.0
    %243 = vmatprep.subr.mxu0 0.0
    %244 = vmatpush1.msra.mxu0 0.0
    %245 = vmatprep.subr.mxu0 0.0
    %246 = vmatpush1.msra.mxu0 0.0
    %247 = vmatprep.subr.mxu0 0.0
    %248 = vmatpush1.msra.mxu0 0.0
    %249 = vmatprep.subr.mxu0 0.0
    %250 = vmatpush1.msra.mxu0 0.0
    %251 = vmatprep.subr.mxu0 0.0
    %252 = vmatpush1.msra.mxu0 0.0
    %253 = vmatprep.subr.mxu0 0.0
    %254 = vmatpush1.msra.mxu0 0.0
    %255 = vmatprep.subr.mxu0 0.0
    %256 = vmatpush1.msra.mxu0 0.0
    %257 = vmatprep.subr.mxu0 0.0
    %258 = vmatpush1.msra.mxu0 0.0
    %259 = vmatprep.subr.mxu0 0.0
    %260 = vmatpush1.msra.mxu0 0.0
    %261 = vmatprep.subr.mxu0 0.0
    %262 = vmatpush1.msra.mxu0 0.0
    %263 = vmatprep.subr.mxu0 0.0
    %264 = vmatpush1.msra.mxu0 0.0
    %265 = vmatprep.subr.mxu0 0.0
    %266 = vmatpush1.msra.mxu0 0.0
    %267 = vmatprep.subr.mxu0 0.0
    %268 = vmatpush1.msra.mxu0 0.0
    %269 = vmatprep.subr.mxu0 0.0
    %270 = vmatpush1.msra.mxu0 0.0
    %271 = vmatprep.subr.mxu0 0.0
    %272 = vmatpush1.msra.mxu0 0.0
    %273 = vmatprep.subr.mxu0 0.0
    %274 = vmatpush1.msra.mxu0 0.0
    %275 = vmatprep.subr.mxu0 0.0
    %276 = vmatpush1.msra.mxu0 0.0
    %277 = vmatprep.subr.mxu0 0.0
    %278 = vmatpush1.msra.mxu0 0.0
    %279 = vmatprep.subr.mxu0 0.0
    %280 = vmatpush1.msra.mxu0 0.0
    %281 = vmatprep.subr.mxu0 0.0
    %282 = vmatpush1.msra.mxu0 0.0
    %283 = vmatprep.subr.mxu0 0.0
    %284 = vmatpush1.msra.mxu0 0.0
    %285 = vmatprep.subr.mxu0 0.0
    %286 = vmatpush1.msra.mxu0 0.0
    %287 = vmatprep.mubr.f32.mxu0 0.0
    %288 = vmatmul.mubr.f32.gmra.mrb[0].mxu0 %v80
    %v289 = vpop.f32.mrb[0].mxu0
    %v290 = vadd.f32 %v76, %v289
    %v291 = vpop.f32.mrb[0].mxu0
    %292 = vmatprep.mubr.f32.mxu0 0.0
    %293 = vmatmul.mubr.f32.gmra.mrb[0].mxu0 %v83
    %v294 = vpop.f32.mrb[0].mxu0
    %v295 = vadd.f32 %v76, %v294
    %v296 = vpop.f32.mrb[0].mxu0
    %297 = vmatprep.mubr.f32.mxu0 0.0
    %298 = vmatmul.mubr.f32.gmra.mrb[0].mxu0 %v86
    %v299 = vpop.f32.mrb[0].mxu0
    %v300 = vadd.f32 %v76, %v299
    %v301 = vpop.f32.mrb[0].mxu0
    %302 = vmatprep.mubr.f32.mxu0 0.0
    %303 = vmatmul.mubr.f32.gmra.mrb[0].mxu0 %v89
    %v304 = vpop.f32.mrb[0].mxu0
    %v305 = vadd.f32 %v76, %v304
    %v306 = vpop.f32.mrb[0].mxu0
    %307 = vmatprep.mubr.f32.mxu0 0.0
    %308 = vmatmul.mubr.f32.gmra.mrb[0].mxu0 %v92
    %v309 = vpop.f32.mrb[0].mxu0
    %v310 = vadd.f32 %v76, %v309
    %v311 = vpop.f32.mrb[0].mxu0
    %312 = vmatprep.mubr.f32.mxu0 0.0
    %313 = vmatmul.mubr.f32.gmra.mrb[0].mxu0 %v95
    %v314 = vpop.f32.mrb[0].mxu0
    %v315 = vadd.f32 %v76, %v314
    %v316 = vpop.f32.mrb[0].mxu0
    %317 = vmatprep.mubr.f32.mxu0 0.0
    %318 = vmatmul.mubr.f32.gmra.mrb[0].mxu0 %v98
    %v319 = vpop.f32.mrb[0].mxu0
    %v320 = vadd.f32 %v76, %v319
    %v321 = vpop.f32.mrb[0].mxu0
    %322 = vmatprep.mubr.f32.mxu0 0.0
    %323 = vmatmul.mubr.f32.gmra.mrb[0].mxu0 %v101
    %v324 = vpop.f32.mrb[0].mxu0
    %v325 = vadd.f32 %v76, %v324
    %v326 = vpop.f32.mrb[0].mxu0
    %327 = vmatprep.mubr.f32.mxu0 0.0
    %328 = vmatmul.mubr.f32.gmra.mrb[0].mxu0 %v104
    %v329 = vpop.f32.mrb[0].mxu0
    %v330 = vadd.f32 %v76, %v329
    %v331 = vpop.f32.mrb[0].mxu0
    %332 = vmatprep.mubr.f32.mxu0 0.0
    %333 = vmatmul.mubr.f32.gmra.mrb[0].mxu0 %v107
    %v334 = vpop.f32.mrb[0].mxu0
    %v335 = vadd.f32 %v76, %v334
    %v336 = vpop.f32.mrb[0].mxu0
    %337 = vmatprep.mubr.f32.mxu0 0.0
    %338 = vmatmul.mubr.f32.gmra.mrb[0].mxu0 %v110
    %v339 = vpop.f32.mrb[0].mxu0
    %v340 = vadd.f32 %v76, %v339
    %v341 = vpop.f32.mrb[0].mxu0
    %342 = vmatprep.mubr.f32.mxu0 0.0
    %343 = vmatmul.mubr.f32.gmra.mrb[0].mxu0 %v113
    %v344 = vpop.f32.mrb[0].mxu0
    %v345 = vadd.f32 %v76, %v344
    %v346 = vpop.f32.mrb[0].mxu0
    %347 = vmatprep.mubr.f32.mxu0 0.0
    %348 = vmatmul.mubr.f32.gmra.mrb[0].mxu0 %v116
    %v349 = vpop.f32.mrb[0].mxu0
    %v350 = vadd.f32 %v76, %v349
    %v351 = vpop.f32.mrb[0].mxu0
    %352 = vmatprep.mubr.f32.mxu0 0.0
    %353 = vmatmul.mubr.f32.gmra.mrb[0].mxu0 %v119
    %v354 = vpop.f32.mrb[0].mxu0
    %v355 = vadd.f32 %v76, %v354
    %v356 = vpop.f32.mrb[0].mxu0
    %357 = vmatprep.mubr.f32.mxu0 0.0
    %358 = vmatmul.mubr.f32.gmra.mrb[0].mxu0 %v122
    %v359 = vpop.f32.mrb[0].mxu0
    %v360 = vadd.f32 %v76, %v359
    %v361 = vpop.f32.mrb[0].mxu0
    %362 = vmatprep.mubr.f32.mxu0 0.0
    %363 = vmatmul.mubr.f32.gmra.mrb[0].mxu0 %v125
    %v364 = vpop.f32.mrb[0].mxu0
    %v365 = vadd.f32 %v76, %v364
    %v366 = vpop.f32.mrb[0].mxu0
    %367 = vmatprep.mubr.f32.mxu0 0.0
    %368 = vmatmul.mubr.f32.gmra.mrb[0].mxu0 %v128
    %v369 = vpop.f32.mrb[0].mxu0
    %v370 = vadd.f32 %v76, %v369
    %v371 = vpop.f32.mrb[0].mxu0
    %372 = vmatprep.mubr.f32.mxu0 0.0
    %373 = vmatmul.mubr.f32.gmra.mrb[0].mxu0 %v131
    %v374 = vpop.f32.mrb[0].mxu0
    %v375 = vadd.f32 %v76, %v374
    %v376 = vpop.f32.mrb[0].mxu0
    %377 = vmatprep.mubr.f32.mxu0 0.0
    %378 = vmatmul.mubr.f32.gmra.mrb[0].mxu0 %v134
    %v379 = vpop.f32.mrb[0].mxu0
    %v380 = vadd.f32 %v76, %v379
    %v381 = vpop.f32.mrb[0].mxu0
    %382 = vmatprep.mubr.f32.mxu0 0.0
    %383 = vmatmul.mubr.f32.gmra.mrb[0].mxu0 %v137
    %v384 = vpop.f32.mrb[0].mxu0
    %v385 = vadd.f32 %v76, %v384
    %v386 = vpop.f32.mrb[0].mxu0
    %387 = vmatprep.mubr.f32.mxu0 0.0
    %388 = vmatmul.mubr.f32.gmra.mrb[0].mxu0 %v140
    %v389 = vpop.f32.mrb[0].mxu0
    %v390 = vadd.f32 %v76, %v389
    %v391 = vpop.f32.mrb[0].mxu0
    %392 = vmatprep.mubr.f32.mxu0 0.0
    %393 = vmatmul.mubr.f32.gmra.mrb[0].mxu0 %v143
    %v394 = vpop.f32.mrb[0].mxu0
    %v395 = vadd.f32 %v76, %v394
    %v396 = vpop.f32.mrb[0].mxu0
    %397 = vmatprep.mubr.f32.mxu0 0.0
    %398 = vmatmul.mubr.f32.gmra.mrb[0].mxu0 %v146
    %v399 = vpop.f32.mrb[0].mxu0
    %v400 = vadd.f32 %v76, %v399
    %v401 = vpop.f32.mrb[0].mxu0
    %402 = vmatprep.mubr.f32.mxu0 0.0
    %403 = vmatmul.mubr.f32.gmra.mrb[0].mxu0 %v149
    %v404 = vpop.f32.mrb[0].mxu0
    %v405 = vadd.f32 %v76, %v404
    %v406 = vpop.f32.mrb[0].mxu0
    %407 = vmatprep.mubr.f32.mxu0 0.0
    %408 = vmatmul.mubr.f32.gmra.mrb[0].mxu0 %v152
    %v409 = vpop.f32.mrb[0].mxu0
    %v410 = vadd.f32 %v76, %v409
    %v411 = vpop.f32.mrb[0].mxu0
    %412 = vmatprep.mubr.f32.mxu0 0.0
    %413 = vmatmul.mubr.f32.gmra.mrb[0].mxu0 %v155
    %v414 = vpop.f32.mrb[0].mxu0
    %v415 = vadd.f32 %v76, %v414
    %v416 = vpop.f32.mrb[0].mxu0
    %417 = vmatprep.mubr.f32.mxu0 0.0
    %418 = vmatmul.mubr.f32.gmra.mrb[0].mxu0 %v158
    %v419 = vpop.f32.mrb[0].mxu0
    %v420 = vadd.f32 %v76, %v419
    %v421 = vpop.f32.mrb[0].mxu0
    %422 = vmatprep.mubr.f32.mxu0 0.0
    %423 = vmatmul.mubr.f32.gmra.mrb[0].mxu0 %v161
    %v424 = vpop.f32.mrb[0].mxu0
    %v425 = vadd.f32 %v76, %v424
    %v426 = vpop.f32.mrb[0].mxu0
    %427 = vmatprep.mubr.f32.mxu0 0.0
    %428 = vmatmul.mubr.f32.gmra.mrb[0].mxu0 %v164
    %v429 = vpop.f32.mrb[0].mxu0
    %v430 = vadd.f32 %v76, %v429
    %v431 = vpop.f32.mrb[0].mxu0
    %432 = vmatprep.mubr.f32.mxu0 0.0
    %433 = vmatmul.mubr.f32.gmra.mrb[0].mxu0 %v167
    %v434 = vpop.f32.mrb[0].mxu0
    %v435 = vadd.f32 %v76, %v434
    %v436 = vpop.f32.mrb[0].mxu0
    %437 = vmatprep.mubr.f32.mxu0 0.0
    %438 = vmatmul.mubr.f32.gmra.mrb[0].mxu0 %v170
    %v439 = vpop.f32.mrb[0].mxu0
    %v440 = vadd.f32 %v76, %v439
    %v441 = vpop.f32.mrb[0].mxu0
    %442 = vmatprep.mubr.f32.mxu0 0.0
    %443 = vmatmul.mubr.f32.gmra.mrb[0].mxu0 %v173
    %v444 = vpop.f32.mrb[0].mxu0
    %v445 = vadd.f32 %v76, %v444
    %v446 = vpop.f32.mrb[0].mxu0
    %447 = vmatprep.mubr.f32.mxu0 0.0
    %448 = vmatmul.mubr.f32.gmra.mrb[0].mxu0 %v176
    %v449 = vpop.f32.mrb[0].mxu0
    %v450 = vadd.f32 %v76, %v449
    %v451 = vpop.f32.mrb[0].mxu0
    %452 = vmatprep.mubr.f32.mxu0 0.0
    %453 = vmatmul.mubr.f32.gmra.mrb[0].mxu0 %v179
    %v454 = vpop.f32.mrb[0].mxu0
    %v455 = vadd.f32 %v76, %v454
    %v456 = vpop.f32.mrb[0].mxu0
    %457 = vmatprep.mubr.f32.mxu0 0.0
    %458 = vmatmul.mubr.f32.gmra.mrb[0].mxu0 %v182
    %v459 = vpop.f32.mrb[0].mxu0
    %v460 = vadd.f32 %v76, %v459
    %v461 = vpop.f32.mrb[0].mxu0
    %462 = vmatprep.mubr.f32.mxu0 0.0
    %463 = vmatmul.mubr.f32.gmra.mrb[0].mxu0 %v185
    %v464 = vpop.f32.mrb[0].mxu0
    %v465 = vadd.f32 %v76, %v464
    %v466 = vpop.f32.mrb[0].mxu0
    %467 = vmatprep.mubr.f32.mxu0 0.0
    %468 = vmatmul.mubr.f32.gmra.mrb[0].mxu0 %v188
    %v469 = vpop.f32.mrb[0].mxu0
    %v470 = vadd.f32 %v76, %v469
    %v471 = vpop.f32.mrb[0].mxu0
    %472 = vmatprep.mubr.f32.mxu0 0.0
    %473 = vmatmul.mubr.f32.gmra.mrb[0].mxu0 %v191
    %v474 = vpop.f32.mrb[0].mxu0
    %v475 = vadd.f32 %v76, %v474
    %v476 = vpop.f32.mrb[0].mxu0
    %477 = vmatprep.mubr.f32.mxu0 0.0
    %478 = vmatmul.mubr.f32.gmra.mrb[0].mxu0 %v194
    %v479 = vpop.f32.mrb[0].mxu0
    %v480 = vadd.f32 %v76, %v479
    %v481 = vpop.f32.mrb[0].mxu0
    %482 = vmatprep.mubr.f32.mxu0 0.0
    %483 = vmatmul.mubr.f32.gmra.mrb[0].mxu0 %v197
    %v484 = vpop.f32.mrb[0].mxu0
    %v485 = vadd.f32 %v76, %v484
    %v486 = vpop.f32.mrb[0].mxu0
    %487 = vmatprep.mubr.f32.mxu0 0.0
    %488 = vmatmul.mubr.f32.gmra.mrb[0].mxu0 %v200
    %v489 = vpop.f32.mrb[0].mxu0
    %v490 = vadd.f32 %v76, %v489
    %v491 = vpop.f32.mrb[0].mxu0
    %492 = vmatprep.mubr.f32.mxu0 0.0
    %493 = vmatmul.mubr.f32.gmra.mrb[0].mxu0 %v203
    %v494 = vpop.f32.mrb[0].mxu0
    %v495 = vadd.f32 %v76, %v494
    %v496 = vpop.f32.mrb[0].mxu0
    %497 = vmatprep.mubr.f32.mxu0 0.0
    %498 = vmatmul.mubr.f32.gmra.mrb[0].mxu0 %v206
    %v499 = vpop.f32.mrb[0].mxu0
    %v500 = vadd.f32 %v76, %v499
    %v501 = vpop.f32.mrb[0].mxu0
    %502 = vmatprep.mubr.f32.mxu0 0.0
    %503 = vmatmul.mubr.f32.gmra.mrb[0].mxu0 %v209
    %v504 = vpop.f32.mrb[0].mxu0
    %v505 = vadd.f32 %v76, %v504
    %v506 = vpop.f32.mrb[0].mxu0
    %507 = vmatprep.mubr.f32.mxu0 0.0
    %508 = vmatmul.mubr.f32.gmra.mrb[0].mxu0 %v212
    %v509 = vpop.f32.mrb[0].mxu0
    %v510 = vadd.f32 %v76, %v509
    %v511 = vpop.f32.mrb[0].mxu0
    %512 = vmatprep.mubr.f32.mxu0 0.0
    %513 = vmatmul.mubr.f32.gmra.mrb[0].mxu0 %v215
    %v514 = vpop.f32.mrb[0].mxu0
    %v515 = vadd.f32 %v76, %v514
    %v516 = vpop.f32.mrb[0].mxu0
    %517 = vmatprep.mubr.f32.mxu0 0.0
    %518 = vmatmul.mubr.f32.gmra.mrb[0].mxu0 %v218
    %v519 = vpop.f32.mrb[0].mxu0
    %v520 = vadd.f32 %v76, %v519
    %v521 = vpop.f32.mrb[0].mxu0
    %522 = vmatprep.mubr.f32.mxu0 0.0
    %523 = vmatmul.mubr.f32.gmra.mrb[0].mxu0 %v221
    %v524 = vpop.f32.mrb[0].mxu0
    %v525 = vadd.f32 %v76, %v524
    %v526 = vpop.f32.mrb[0].mxu0
    %527 = vdwg.mxu0
    %v528 = vmul.f32 %v18, %v18
    %v529 = vsel %vm78, %v528, 0.0
    %530 = vadd.xlane.f32.xlu0 %v529
    %v531 = vpop.xlane.xlu0 %530
    %v532 = vmul.f32 %v290, %v290
    %v533 = vmul.f32 %v295, %v295
    %v534 = vmul.f32 %v300, %v300
    %v535 = vmul.f32 %v305, %v305
    %v536 = vmul.f32 %v310, %v310
    %v537 = vmul.f32 %v315, %v315
    %v538 = vmul.f32 %v320, %v320
    %v539 = vmul.f32 %v325, %v325
    %v540 = vmul.f32 %v330, %v330
    %v541 = vmul.f32 %v335, %v335
    %v542 = vmul.f32 %v340, %v340
    %v543 = vmul.f32 %v345, %v345
    %v544 = vmul.f32 %v350, %v350
    %v545 = vmul.f32 %v355, %v355
    %v546 = vmul.f32 %v360, %v360
    %v547 = vmul.f32 %v365, %v365
    %v548 = vmul.f32 %v370, %v370
    %v549 = vmul.f32 %v375, %v375
    %v550 = vmul.f32 %v380, %v380
    %v551 = vmul.f32 %v385, %v385
    %v552 = vmul.f32 %v390, %v390
    %v553 = vmul.f32 %v395, %v395
    %v554 = vmul.f32 %v400, %v400
    %v555 = vmul.f32 %v405, %v405
    %v556 = vmul.f32 %v410, %v410
    %v557 = vmul.f32 %v415, %v415
    %v558 = vmul.f32 %v420, %v420
    %v559 = vmul.f32 %v425, %v425
    %v560 = vmul.f32 %v430, %v430
    %v561 = vmul.f32 %v435, %v435
    %v562 = vmul.f32 %v440, %v440
    %v563 = vmul.f32 %v445, %v445
    %v564 = vmul.f32 %v450, %v450
    %v565 = vmul.f32 %v455, %v455
    %v566 = vmul.f32 %v460, %v460
    %v567 = vmul.f32 %v465, %v465
    %v568 = vmul.f32 %v470, %v470
    %v569 = vmul.f32 %v475, %v475
    %v570 = vmul.f32 %v480, %v480
    %v571 = vmul.f32 %v485, %v485
    %v572 = vmul.f32 %v490, %v490
    %v573 = vmul.f32 %v495, %v495
    %v574 = vmul.f32 %v500, %v500
    %v575 = vmul.f32 %v505, %v505
    %v576 = vmul.f32 %v510, %v510
    %v577 = vmul.f32 %v515, %v515
    %v578 = vmul.f32 %v520, %v520
    %v579 = vmul.f32 %v525, %v525
    %v580 = vsel %vm78, %v532, 0.0
    %581 = vadd.xlane.f32.xlu0 %v580
    %v582 = vpop.xlane.xlu0 %581
    %v583 = vsel %vm78, %v533, 0.0
    %584 = vadd.xlane.f32.xlu0 %v583
    %v585 = vpop.xlane.xlu0 %584
    %v586 = vsel %vm78, %v534, 0.0
    %587 = vadd.xlane.f32.xlu0 %v586
    %v588 = vpop.xlane.xlu0 %587
    %v589 = vsel %vm78, %v535, 0.0
    %590 = vadd.xlane.f32.xlu0 %v589
    %v591 = vpop.xlane.xlu0 %590
    %v592 = vsel %vm78, %v536, 0.0
    %593 = vadd.xlane.f32.xlu0 %v592
    %v594 = vpop.xlane.xlu0 %593
    %v595 = vsel %vm78, %v537, 0.0
    %596 = vadd.xlane.f32.xlu0 %v595
    %v597 = vpop.xlane.xlu0 %596
    %v598 = vsel %vm78, %v538, 0.0
    %599 = vadd.xlane.f32.xlu0 %v598
    %v600 = vpop.xlane.xlu0 %599
    %v601 = vsel %vm78, %v539, 0.0
    %602 = vadd.xlane.f32.xlu0 %v601
    %v603 = vpop.xlane.xlu0 %602
    %v604 = vsel %vm78, %v540, 0.0
    %605 = vadd.xlane.f32.xlu0 %v604
    %v606 = vpop.xlane.xlu0 %605
    %v607 = vsel %vm78, %v541, 0.0
    %608 = vadd.xlane.f32.xlu0 %v607
    %v609 = vpop.xlane.xlu0 %608
    %v610 = vsel %vm78, %v542, 0.0
    %611 = vadd.xlane.f32.xlu0 %v610
    %v612 = vpop.xlane.xlu0 %611
    %v613 = vsel %vm78, %v543, 0.0
    %614 = vadd.xlane.f32.xlu0 %v613
    %v615 = vpop.xlane.xlu0 %614
    %v616 = vsel %vm78, %v544, 0.0
    %617 = vadd.xlane.f32.xlu0 %v616
    %v618 = vpop.xlane.xlu0 %617
    %v619 = vsel %vm78, %v545, 0.0
    %620 = vadd.xlane.f32.xlu0 %v619
    %v621 = vpop.xlane.xlu0 %620
    %v622 = vsel %vm78, %v546, 0.0
    %623 = vadd.xlane.f32.xlu0 %v622
    %v624 = vpop.xlane.xlu0 %623
    %v625 = vsel %vm78, %v547, 0.0
    %626 = vadd.xlane.f32.xlu0 %v625
    %v627 = vpop.xlane.xlu0 %626
    %v628 = vsel %vm78, %v548, 0.0
    %629 = vadd.xlane.f32.xlu0 %v628
    %v630 = vpop.xlane.xlu0 %629
    %v631 = vsel %vm78, %v549, 0.0
    %632 = vadd.xlane.f32.xlu0 %v631
    %v633 = vpop.xlane.xlu0 %632
    %v634 = vsel %vm78, %v550, 0.0
    %635 = vadd.xlane.f32.xlu0 %v634
    %v636 = vpop.xlane.xlu0 %635
    %v637 = vsel %vm78, %v551, 0.0
    %638 = vadd.xlane.f32.xlu0 %v637
    %v639 = vpop.xlane.xlu0 %638
    %v640 = vsel %vm78, %v552, 0.0
    %641 = vadd.xlane.f32.xlu0 %v640
    %v642 = vpop.xlane.xlu0 %641
    %v643 = vsel %vm78, %v553, 0.0
    %644 = vadd.xlane.f32.xlu0 %v643
    %v645 = vpop.xlane.xlu0 %644
    %v646 = vsel %vm78, %v554, 0.0
    %647 = vadd.xlane.f32.xlu0 %v646
    %v648 = vpop.xlane.xlu0 %647
    %v649 = vsel %vm78, %v555, 0.0
    %650 = vadd.xlane.f32.xlu0 %v649
    %v651 = vpop.xlane.xlu0 %650
    %v652 = vsel %vm78, %v556, 0.0
    %653 = vadd.xlane.f32.xlu0 %v652
    %v654 = vpop.xlane.xlu0 %653
    %v655 = vsel %vm78, %v557, 0.0
    %656 = vadd.xlane.f32.xlu0 %v655
    %v657 = vpop.xlane.xlu0 %656
    %v658 = vsel %vm78, %v558, 0.0
    %659 = vadd.xlane.f32.xlu0 %v658
    %v660 = vpop.xlane.xlu0 %659
    %v661 = vsel %vm78, %v559, 0.0
    %662 = vadd.xlane.f32.xlu0 %v661
    %v663 = vpop.xlane.xlu0 %662
    %v664 = vsel %vm78, %v560, 0.0
    %665 = vadd.xlane.f32.xlu0 %v664
    %v666 = vpop.xlane.xlu0 %665
    %v667 = vsel %vm78, %v561, 0.0
    %668 = vadd.xlane.f32.xlu0 %v667
    %v669 = vpop.xlane.xlu0 %668
    %v670 = vsel %vm78, %v562, 0.0
    %671 = vadd.xlane.f32.xlu0 %v670
    %v672 = vpop.xlane.xlu0 %671
    %v673 = vsel %vm78, %v563, 0.0
    %674 = vadd.xlane.f32.xlu0 %v673
    %v675 = vpop.xlane.xlu0 %674
    %v676 = vsel %vm78, %v564, 0.0
    %677 = vadd.xlane.f32.xlu0 %v676
    %v678 = vpop.xlane.xlu0 %677
    %v679 = vsel %vm78, %v565, 0.0
    %680 = vadd.xlane.f32.xlu0 %v679
    %v681 = vpop.xlane.xlu0 %680
    %v682 = vsel %vm78, %v566, 0.0
    %683 = vadd.xlane.f32.xlu0 %v682
    %v684 = vpop.xlane.xlu0 %683
    %v685 = vsel %vm78, %v567, 0.0
    %686 = vadd.xlane.f32.xlu0 %v685
    %v687 = vpop.xlane.xlu0 %686
    %v688 = vsel %vm78, %v568, 0.0
    %689 = vadd.xlane.f32.xlu0 %v688
    %v690 = vpop.xlane.xlu0 %689
    %v691 = vsel %vm78, %v569, 0.0
    %692 = vadd.xlane.f32.xlu0 %v691
    %v693 = vpop.xlane.xlu0 %692
    %v694 = vsel %vm78, %v570, 0.0
    %695 = vadd.xlane.f32.xlu0 %v694
    %v696 = vpop.xlane.xlu0 %695
    %v697 = vsel %vm78, %v571, 0.0
    %698 = vadd.xlane.f32.xlu0 %v697
    %v699 = vpop.xlane.xlu0 %698
    %v700 = vsel %vm78, %v572, 0.0
    %701 = vadd.xlane.f32.xlu0 %v700
    %v702 = vpop.xlane.xlu0 %701
    %v703 = vsel %vm78, %v573, 0.0
    %704 = vadd.xlane.f32.xlu0 %v703
    %v705 = vpop.xlane.xlu0 %704
    %v706 = vsel %vm78, %v574, 0.0
    %707 = vadd.xlane.f32.xlu0 %v706
    %v708 = vpop.xlane.xlu0 %707
    %v709 = vsel %vm78, %v575, 0.0
    %710 = vadd.xlane.f32.xlu0 %v709
    %v711 = vpop.xlane.xlu0 %710
    %v712 = vsel %vm78, %v576, 0.0
    %713 = vadd.xlane.f32.xlu0 %v712
    %v714 = vpop.xlane.xlu0 %713
    %v715 = vsel %vm78, %v577, 0.0
    %716 = vadd.xlane.f32.xlu0 %v715
    %v717 = vpop.xlane.xlu0 %716
    %v718 = vsel %vm78, %v578, 0.0
    %719 = vadd.xlane.f32.xlu0 %v718
    %v720 = vpop.xlane.xlu0 %719
    %v721 = vsel %vm78, %v579, 0.0
    %722 = vadd.xlane.f32.xlu0 %v721
    %v723 = vpop.xlane.xlu0 %722
    %v725 = vsel %vm78, %v18, 0
    %v728 = vsel %vm78, %v290, 0
    %v731 = vsel %vm78, %v295, 0
    %v734 = vsel %vm78, %v300, 0
    %v737 = vsel %vm78, %v305, 0
    %v740 = vsel %vm78, %v310, 0
    %v743 = vsel %vm78, %v315, 0
    %v746 = vsel %vm78, %v320, 0
    %v749 = vsel %vm78, %v325, 0
    %v752 = vsel %vm78, %v330, 0
    %v755 = vsel %vm78, %v335, 0
    %v758 = vsel %vm78, %v340, 0
    %v761 = vsel %vm78, %v345, 0
    %v764 = vsel %vm78, %v350, 0
    %v767 = vsel %vm78, %v355, 0
    %v770 = vsel %vm78, %v360, 0
    %v773 = vsel %vm78, %v365, 0
    %v776 = vsel %vm78, %v370, 0
    %v779 = vsel %vm78, %v375, 0
    %v782 = vsel %vm78, %v380, 0
    %v785 = vsel %vm78, %v385, 0
    %v788 = vsel %vm78, %v390, 0
    %v791 = vsel %vm78, %v395, 0
    %v794 = vsel %vm78, %v400, 0
    %v797 = vsel %vm78, %v405, 0
    %v800 = vsel %vm78, %v410, 0
    %v803 = vsel %vm78, %v415, 0
    %v806 = vsel %vm78, %v420, 0
    %v809 = vsel %vm78, %v425, 0
    %v812 = vsel %vm78, %v430, 0
    %v815 = vsel %vm78, %v435, 0
    %v818 = vsel %vm78, %v440, 0
    %v821 = vsel %vm78, %v445, 0
    %v824 = vsel %vm78, %v450, 0
    %v827 = vsel %vm78, %v455, 0
    %v830 = vsel %vm78, %v460, 0
    %v833 = vsel %vm78, %v465, 0
    %v836 = vsel %vm78, %v470, 0
    %v839 = vsel %vm78, %v475, 0
    %v842 = vsel %vm78, %v480, 0
    %v845 = vsel %vm78, %v485, 0
    %v848 = vsel %vm78, %v490, 0
    %v851 = vsel %vm78, %v495, 0
    %v854 = vsel %vm78, %v500, 0
    %v857 = vsel %vm78, %v505, 0
    %v860 = vsel %vm78, %v510, 0
    %v863 = vsel %vm78, %v515, 0
    %v866 = vsel %vm78, %v520, 0
    %v869 = vsel %vm78, %v525, 0
    %871 = vmatprep.subr.mxu0 0.0
    %872 = vmatpush1.xpose.msra.mxu0 %v728
    %873 = vmatprep.subr.mxu0 0.0
    %874 = vmatpush1.xpose.msra.mxu0 %v731
    %875 = vmatprep.subr.mxu0 0.0
    %876 = vmatpush1.xpose.msra.mxu0 %v734
    %877 = vmatprep.subr.mxu0 0.0
    %878 = vmatpush1.xpose.msra.mxu0 %v737
    %879 = vmatprep.subr.mxu0 0.0
    %880 = vmatpush1.xpose.msra.mxu0 %v740
    %881 = vmatprep.subr.mxu0 0.0
    %882 = vmatpush1.xpose.msra.mxu0 %v743
    %883 = vmatprep.subr.mxu0 0.0
    %884 = vmatpush1.xpose.msra.mxu0 %v746
    %885 = vmatprep.subr.mxu0 0.0
    %886 = vmatpush1.xpose.msra.mxu0 %v749
    %887 = vmatprep.subr.mxu0 0.0
    %888 = vmatpush1.xpose.msra.mxu0 %v752
    %889 = vmatprep.subr.mxu0 0.0
    %890 = vmatpush1.xpose.msra.mxu0 %v755
    %891 = vmatprep.subr.mxu0 0.0
    %892 = vmatpush1.xpose.msra.mxu0 %v758
    %893 = vmatprep.subr.mxu0 0.0
    %894 = vmatpush1.xpose.msra.mxu0 %v761
    %895 = vmatprep.subr.mxu0 0.0
    %896 = vmatpush1.xpose.msra.mxu0 %v764
    %897 = vmatprep.subr.mxu0 0.0
    %898 = vmatpush1.xpose.msra.mxu0 %v767
    %899 = vmatprep.subr.mxu0 0.0
    %900 = vmatpush1.xpose.msra.mxu0 %v770
    %901 = vmatprep.subr.mxu0 0.0
    %902 = vmatpush1.xpose.msra.mxu0 %v773
    %903 = vmatprep.subr.mxu0 0.0
    %904 = vmatpush1.xpose.msra.mxu0 %v776
    %905 = vmatprep.subr.mxu0 0.0
    %906 = vmatpush1.xpose.msra.mxu0 %v779
    %907 = vmatprep.subr.mxu0 0.0
    %908 = vmatpush1.xpose.msra.mxu0 %v782
    %909 = vmatprep.subr.mxu0 0.0
    %910 = vmatpush1.xpose.msra.mxu0 %v785
    %911 = vmatprep.subr.mxu0 0.0
    %912 = vmatpush1.xpose.msra.mxu0 %v788
    %913 = vmatprep.subr.mxu0 0.0
    %914 = vmatpush1.xpose.msra.mxu0 %v791
    %915 = vmatprep.subr.mxu0 0.0
    %916 = vmatpush1.xpose.msra.mxu0 %v794
    %917 = vmatprep.subr.mxu0 0.0
    %918 = vmatpush1.xpose.msra.mxu0 %v797
    %919 = vmatprep.subr.mxu0 0.0
    %920 = vmatpush1.xpose.msra.mxu0 %v800
    %921 = vmatprep.subr.mxu0 0.0
    %922 = vmatpush1.xpose.msra.mxu0 %v803
    %923 = vmatprep.subr.mxu0 0.0
    %924 = vmatpush1.xpose.msra.mxu0 %v806
    %925 = vmatprep.subr.mxu0 0.0
    %926 = vmatpush1.xpose.msra.mxu0 %v809
    %927 = vmatprep.subr.mxu0 0.0
    %928 = vmatpush1.xpose.msra.mxu0 %v812
    %929 = vmatprep.subr.mxu0 0.0
    %930 = vmatpush1.xpose.msra.mxu0 %v815
    %931 = vmatprep.subr.mxu0 0.0
    %932 = vmatpush1.xpose.msra.mxu0 %v818
    %933 = vmatprep.subr.mxu0 0.0
    %934 = vmatpush1.xpose.msra.mxu0 %v821
    %935 = vmatprep.mubr.f32.mxu0 0.0
    %936 = vmatmul.mubr.f32.gmra.mrb[0].mxu0 %v725
    %v937 = vpop.f32.mrb[0].mxu0
    %v938 = vadd.f32 0.0, %v937
    %v939 = vpop.f32.mrb[0].mxu0
    %v940 = vadd.f32 0.0, %v939
    %941 = vdwg.mxu0
    %942 = vmatprep.subr.mxu0 0.0
    %943 = vmatpush1.xpose.msra.mxu0 %v824
    %944 = vmatprep.subr.mxu0 0.0
    %945 = vmatpush1.xpose.msra.mxu0 %v827
    %946 = vmatprep.subr.mxu0 0.0
    %947 = vmatpush1.xpose.msra.mxu0 %v830
    %948 = vmatprep.subr.mxu0 0.0
    %949 = vmatpush1.xpose.msra.mxu0 %v833
    %950 = vmatprep.subr.mxu0 0.0
    %951 = vmatpush1.xpose.msra.mxu0 %v836
    %952 = vmatprep.subr.mxu0 0.0
    %953 = vmatpush1.xpose.msra.mxu0 %v839
    %954 = vmatprep.subr.mxu0 0.0
    %955 = vmatpush1.xpose.msra.mxu0 %v842
    %956 = vmatprep.subr.mxu0 0.0
    %957 = vmatpush1.xpose.msra.mxu0 %v845
    %958 = vmatprep.subr.mxu0 0.0
    %959 = vmatpush1.xpose.msra.mxu0 %v848
    %960 = vmatprep.subr.mxu0 0.0
    %961 = vmatpush1.xpose.msra.mxu0 %v851
    %962 = vmatprep.subr.mxu0 0.0
    %963 = vmatpush1.xpose.msra.mxu0 %v854
    %964 = vmatprep.subr.mxu0 0.0
    %965 = vmatpush1.xpose.msra.mxu0 %v857
    %966 = vmatprep.subr.mxu0 0.0
    %967 = vmatpush1.xpose.msra.mxu0 %v860
    %968 = vmatprep.subr.mxu0 0.0
    %969 = vmatpush1.xpose.msra.mxu0 %v863
    %970 = vmatprep.subr.mxu0 0.0
    %971 = vmatpush1.xpose.msra.mxu0 %v866
    %972 = vmatprep.subr.mxu0 0.0
    %973 = vmatpush1.xpose.msra.mxu0 %v869
    %974 = vmatprep.subr.mxu0 0.0
    %975 = vmatpush1.xpose.msra.mxu0 0.0
    %976 = vmatprep.subr.mxu0 0.0
    %977 = vmatpush1.xpose.msra.mxu0 0.0
    %978 = vmatprep.subr.mxu0 0.0
    %979 = vmatpush1.xpose.msra.mxu0 0.0
    %980 = vmatprep.subr.mxu0 0.0
    %981 = vmatpush1.xpose.msra.mxu0 0.0
    %982 = vmatprep.subr.mxu0 0.0
    %983 = vmatpush1.xpose.msra.mxu0 0.0
    %984 = vmatprep.subr.mxu0 0.0
    %985 = vmatpush1.xpose.msra.mxu0 0.0
    %986 = vmatprep.subr.mxu0 0.0
    %987 = vmatpush1.xpose.msra.mxu0 0.0
    %988 = vmatprep.subr.mxu0 0.0
    %989 = vmatpush1.xpose.msra.mxu0 0.0
    %990 = vmatprep.subr.mxu0 0.0
    %991 = vmatpush1.xpose.msra.mxu0 0.0
    %992 = vmatprep.subr.mxu0 0.0
    %993 = vmatpush1.xpose.msra.mxu0 0.0
    %994 = vmatprep.subr.mxu0 0.0
    %995 = vmatpush1.xpose.msra.mxu0 0.0
    %996 = vmatprep.subr.mxu0 0.0
    %997 = vmatpush1.xpose.msra.mxu0 0.0
    %998 = vmatprep.subr.mxu0 0.0
    %999 = vmatpush1.xpose.msra.mxu0 0.0
    %1000 = vmatprep.subr.mxu0 0.0
    %1001 = vmatpush1.xpose.msra.mxu0 0.0
    %1002 = vmatprep.subr.mxu0 0.0
    %1003 = vmatpush1.xpose.msra.mxu0 0.0
    %1004 = vmatprep.subr.mxu0 0.0
    %1005 = vmatpush1.xpose.msra.mxu0 0.0
    %1006 = vmatprep.mubr.f32.mxu0 0.0
    %1007 = vmatmul.mubr.f32.gmra.mrb[0].mxu0 %v725
    %v1008 = vpop.f32.mrb[0].mxu0
    %v1009 = vadd.f32 0.0, %v1008
    %v1010 = vpop.f32.mrb[0].mxu0
    %1011 = vdwg.mxu0
    %v1060 = vlaneseq
    %v1061 = vand.u32 %v1060, 127
    %v1062 = vlaneseq
    %v1063 = vshrl.u32 %v1062, 7
    %v1064 = vsub.s32 %v1061, %v1063
    %v1065 = vrot.slane %v582, %v1064
    %v1066 = vadd.s32 %v1061, 4294967288
    %v1067 = vlaneseq
    %v1068 = vshrl.u32 %v1067, 7
    %v1069 = vsub.s32 %v1066, %v1068
    %v1070 = vrot.slane %v585, %v1069
    %vm1071 = vcmask 130112
    %v1072 = vsel %vm1071, %v1070, %v1065
    %v1073 = vadd.s32 %v1061, 4294967280
    %v1074 = vlaneseq
    %v1075 = vshrl.u32 %v1074, 7
    %v1076 = vsub.s32 %v1073, %v1075
    %v1077 = vrot.slane %v588, %v1076
    %vm1078 = vcmask 195712
    %v1079 = vsel %vm1078, %v1077, %v1072
    %v1080 = vadd.s32 %v1061, 4294967272
    %v1081 = vlaneseq
    %v1082 = vshrl.u32 %v1081, 7
    %v1083 = vsub.s32 %v1080, %v1082
    %v1084 = vrot.slane %v591, %v1083
    %vm1085 = vcmask 261312
    %v1086 = vsel %vm1085, %v1084, %v1079
    %v1087 = vadd.s32 %v1061, 4294967264
    %v1088 = vlaneseq
    %v1089 = vshrl.u32 %v1088, 7
    %v1090 = vsub.s32 %v1087, %v1089
    %v1091 = vrot.slane %v594, %v1090
    %vm1092 = vcmask 326912
    %v1093 = vsel %vm1092, %v1091, %v1086
    %v1094 = vadd.s32 %v1061, 4294967256
    %v1095 = vlaneseq
    %v1096 = vshrl.u32 %v1095, 7
    %v1097 = vsub.s32 %v1094, %v1096
    %v1098 = vrot.slane %v597, %v1097
    %vm1099 = vcmask 392512
    %v1100 = vsel %vm1099, %v1098, %v1093
    %v1101 = vadd.s32 %v1061, 4294967248
    %v1102 = vlaneseq
    %v1103 = vshrl.u32 %v1102, 7
    %v1104 = vsub.s32 %v1101, %v1103
    %v1105 = vrot.slane %v600, %v1104
    %vm1106 = vcmask 458112
    %v1107 = vsel %vm1106, %v1105, %v1100
    %v1108 = vadd.s32 %v1061, 4294967240
    %v1109 = vlaneseq
    %v1110 = vshrl.u32 %v1109, 7
    %v1111 = vsub.s32 %v1108, %v1110
    %v1112 = vrot.slane %v603, %v1111
    %vm1113 = vcmask 523712
    %v1114 = vsel %vm1113, %v1112, %v1107
    %v1115 = vadd.s32 %v1061, 4294967232
    %v1116 = vlaneseq
    %v1117 = vshrl.u32 %v1116, 7
    %v1118 = vsub.s32 %v1115, %v1117
    %v1119 = vrot.slane %v606, %v1118
    %vm1120 = vcmask 589312
    %v1121 = vsel %vm1120, %v1119, %v1114
    %v1122 = vadd.s32 %v1061, 4294967224
    %v1123 = vlaneseq
    %v1124 = vshrl.u32 %v1123, 7
    %v1125 = vsub.s32 %v1122, %v1124
    %v1126 = vrot.slane %v609, %v1125
    %vm1127 = vcmask 654912
    %v1128 = vsel %vm1127, %v1126, %v1121
    %v1129 = vadd.s32 %v1061, 4294967216
    %v1130 = vlaneseq
    %v1131 = vshrl.u32 %v1130, 7
    %v1132 = vsub.s32 %v1129, %v1131
    %v1133 = vrot.slane %v612, %v1132
    %vm1134 = vcmask 720512
    %v1135 = vsel %vm1134, %v1133, %v1128
    %v1136 = vadd.s32 %v1061, 4294967208
    %v1137 = vlaneseq
    %v1138 = vshrl.u32 %v1137, 7
    %v1139 = vsub.s32 %v1136, %v1138
    %v1140 = vrot.slane %v615, %v1139
    %vm1141 = vcmask 786112
    %v1142 = vsel %vm1141, %v1140, %v1135
    %v1143 = vadd.s32 %v1061, 4294967200
    %v1144 = vlaneseq
    %v1145 = vshrl.u32 %v1144, 7
    %v1146 = vsub.s32 %v1143, %v1145
    %v1147 = vrot.slane %v618, %v1146
    %vm1148 = vcmask 851712
    %v1149 = vsel %vm1148, %v1147, %v1142
    %v1150 = vadd.s32 %v1061, 4294967192
    %v1151 = vlaneseq
    %v1152 = vshrl.u32 %v1151, 7
    %v1153 = vsub.s32 %v1150, %v1152
    %v1154 = vrot.slane %v621, %v1153
    %vm1155 = vcmask 917312
    %v1156 = vsel %vm1155, %v1154, %v1149
    %v1157 = vadd.s32 %v1061, 4294967184
    %v1158 = vlaneseq
    %v1159 = vshrl.u32 %v1158, 7
    %v1160 = vsub.s32 %v1157, %v1159
    %v1161 = vrot.slane %v624, %v1160
    %vm1162 = vcmask 982912
    %v1163 = vsel %vm1162, %v1161, %v1156
    %v1164 = vadd.s32 %v1061, 4294967176
    %v1165 = vlaneseq
    %v1166 = vshrl.u32 %v1165, 7
    %v1167 = vsub.s32 %v1164, %v1166
    %v1168 = vrot.slane %v627, %v1167
    %vm1169 = vcmask 1048512
    %v1170 = vsel %vm1169, %v1168, %v1163
    %v1171 = vlaneseq
    %v1172 = vshrl.u32 %v1171, 7
    %v1173 = vsub.s32 %v1061, %v1172
    %v1174 = vrot.slane %v630, %v1173
    %v1175 = vlaneseq
    %v1176 = vshrl.u32 %v1175, 7
    %v1177 = vsub.s32 %v1066, %v1176
    %v1178 = vrot.slane %v633, %v1177
    %v1179 = vsel %vm1071, %v1178, %v1174
    %v1180 = vlaneseq
    %v1181 = vshrl.u32 %v1180, 7
    %v1182 = vsub.s32 %v1073, %v1181
    %v1183 = vrot.slane %v636, %v1182
    %v1184 = vsel %vm1078, %v1183, %v1179
    %v1185 = vlaneseq
    %v1186 = vshrl.u32 %v1185, 7
    %v1187 = vsub.s32 %v1080, %v1186
    %v1188 = vrot.slane %v639, %v1187
    %v1189 = vsel %vm1085, %v1188, %v1184
    %v1190 = vlaneseq
    %v1191 = vshrl.u32 %v1190, 7
    %v1192 = vsub.s32 %v1087, %v1191
    %v1193 = vrot.slane %v642, %v1192
    %v1194 = vsel %vm1092, %v1193, %v1189
    %v1195 = vlaneseq
    %v1196 = vshrl.u32 %v1195, 7
    %v1197 = vsub.s32 %v1094, %v1196
    %v1198 = vrot.slane %v645, %v1197
    %v1199 = vsel %vm1099, %v1198, %v1194
    %v1200 = vlaneseq
    %v1201 = vshrl.u32 %v1200, 7
    %v1202 = vsub.s32 %v1101, %v1201
    %v1203 = vrot.slane %v648, %v1202
    %v1204 = vsel %vm1106, %v1203, %v1199
    %v1205 = vlaneseq
    %v1206 = vshrl.u32 %v1205, 7
    %v1207 = vsub.s32 %v1108, %v1206
    %v1208 = vrot.slane %v651, %v1207
    %v1209 = vsel %vm1113, %v1208, %v1204
    %v1210 = vlaneseq
    %v1211 = vshrl.u32 %v1210, 7
    %v1212 = vsub.s32 %v1115, %v1211
    %v1213 = vrot.slane %v654, %v1212
    %v1214 = vsel %vm1120, %v1213, %v1209
    %v1215 = vlaneseq
    %v1216 = vshrl.u32 %v1215, 7
    %v1217 = vsub.s32 %v1122, %v1216
    %v1218 = vrot.slane %v657, %v1217
    %v1219 = vsel %vm1127, %v1218, %v1214
    %v1220 = vlaneseq
    %v1221 = vshrl.u32 %v1220, 7
    %v1222 = vsub.s32 %v1129, %v1221
    %v1223 = vrot.slane %v660, %v1222
    %v1224 = vsel %vm1134, %v1223, %v1219
    %v1225 = vlaneseq
    %v1226 = vshrl.u32 %v1225, 7
    %v1227 = vsub.s32 %v1136, %v1226
    %v1228 = vrot.slane %v663, %v1227
    %v1229 = vsel %vm1141, %v1228, %v1224
    %v1230 = vlaneseq
    %v1231 = vshrl.u32 %v1230, 7
    %v1232 = vsub.s32 %v1143, %v1231
    %v1233 = vrot.slane %v666, %v1232
    %v1234 = vsel %vm1148, %v1233, %v1229
    %v1235 = vlaneseq
    %v1236 = vshrl.u32 %v1235, 7
    %v1237 = vsub.s32 %v1150, %v1236
    %v1238 = vrot.slane %v669, %v1237
    %v1239 = vsel %vm1155, %v1238, %v1234
    %v1240 = vlaneseq
    %v1241 = vshrl.u32 %v1240, 7
    %v1242 = vsub.s32 %v1157, %v1241
    %v1243 = vrot.slane %v672, %v1242
    %v1244 = vsel %vm1162, %v1243, %v1239
    %v1245 = vlaneseq
    %v1246 = vshrl.u32 %v1245, 7
    %v1247 = vsub.s32 %v1164, %v1246
    %v1248 = vrot.slane %v675, %v1247
    %v1249 = vsel %vm1169, %v1248, %v1244
    %v1250 = vlaneseq
    %v1251 = vshrl.u32 %v1250, 7
    %v1252 = vsub.s32 %v1061, %v1251
    %v1253 = vrot.slane %v678, %v1252
    %v1254 = vlaneseq
    %v1255 = vshrl.u32 %v1254, 7
    %v1256 = vsub.s32 %v1066, %v1255
    %v1257 = vrot.slane %v681, %v1256
    %v1258 = vsel %vm1071, %v1257, %v1253
    %v1259 = vlaneseq
    %v1260 = vshrl.u32 %v1259, 7
    %v1261 = vsub.s32 %v1073, %v1260
    %v1262 = vrot.slane %v684, %v1261
    %v1263 = vsel %vm1078, %v1262, %v1258
    %v1264 = vlaneseq
    %v1265 = vshrl.u32 %v1264, 7
    %v1266 = vsub.s32 %v1080, %v1265
    %v1267 = vrot.slane %v687, %v1266
    %v1268 = vsel %vm1085, %v1267, %v1263
    %v1269 = vlaneseq
    %v1270 = vshrl.u32 %v1269, 7
    %v1271 = vsub.s32 %v1087, %v1270
    %v1272 = vrot.slane %v690, %v1271
    %v1273 = vsel %vm1092, %v1272, %v1268
    %v1274 = vlaneseq
    %v1275 = vshrl.u32 %v1274, 7
    %v1276 = vsub.s32 %v1094, %v1275
    %v1277 = vrot.slane %v693, %v1276
    %v1278 = vsel %vm1099, %v1277, %v1273
    %v1279 = vlaneseq
    %v1280 = vshrl.u32 %v1279, 7
    %v1281 = vsub.s32 %v1101, %v1280
    %v1282 = vrot.slane %v696, %v1281
    %v1283 = vsel %vm1106, %v1282, %v1278
    %v1284 = vlaneseq
    %v1285 = vshrl.u32 %v1284, 7
    %v1286 = vsub.s32 %v1108, %v1285
    %v1287 = vrot.slane %v699, %v1286
    %v1288 = vsel %vm1113, %v1287, %v1283
    %v1289 = vlaneseq
    %v1290 = vshrl.u32 %v1289, 7
    %v1291 = vsub.s32 %v1115, %v1290
    %v1292 = vrot.slane %v702, %v1291
    %v1293 = vsel %vm1120, %v1292, %v1288
    %v1294 = vlaneseq
    %v1295 = vshrl.u32 %v1294, 7
    %v1296 = vsub.s32 %v1122, %v1295
    %v1297 = vrot.slane %v705, %v1296
    %v1298 = vsel %vm1127, %v1297, %v1293
    %v1299 = vlaneseq
    %v1300 = vshrl.u32 %v1299, 7
    %v1301 = vsub.s32 %v1129, %v1300
    %v1302 = vrot.slane %v708, %v1301
    %v1303 = vsel %vm1134, %v1302, %v1298
    %v1304 = vlaneseq
    %v1305 = vshrl.u32 %v1304, 7
    %v1306 = vsub.s32 %v1136, %v1305
    %v1307 = vrot.slane %v711, %v1306
    %v1308 = vsel %vm1141, %v1307, %v1303
    %v1309 = vlaneseq
    %v1310 = vshrl.u32 %v1309, 7
    %v1311 = vsub.s32 %v1143, %v1310
    %v1312 = vrot.slane %v714, %v1311
    %v1313 = vsel %vm1148, %v1312, %v1308
    %v1314 = vlaneseq
    %v1315 = vshrl.u32 %v1314, 7
    %v1316 = vsub.s32 %v1150, %v1315
    %v1317 = vrot.slane %v717, %v1316
    %v1318 = vsel %vm1155, %v1317, %v1313
    %v1319 = vlaneseq
    %v1320 = vshrl.u32 %v1319, 7
    %v1321 = vsub.s32 %v1157, %v1320
    %v1322 = vrot.slane %v720, %v1321
    %v1323 = vsel %vm1162, %v1322, %v1318
    %v1324 = vlaneseq
    %v1325 = vshrl.u32 %v1324, 7
    %v1326 = vsub.s32 %v1164, %v1325
    %v1327 = vrot.slane %v723, %v1326
    %v1328 = vsel %vm1169, %v1327, %v1323
    %vm1329 = vcmask 1042434
    %v1330 = vsel %vm1329, %v1170, %v1170
    %vm1331 = vcmask 1043459
    %v1332 = vsel %vm1331, %v1170, %v1330
    %vm1333 = vcmask 1044484
    %v1334 = vsel %vm1333, %v1170, %v1332
    %vm1335 = vcmask 1045509
    %v1336 = vsel %vm1335, %v1170, %v1334
    %vm1337 = vcmask 1046534
    %v1338 = vsel %vm1337, %v1170, %v1336
    %vm1339 = vcmask 1047559
    %v1340 = vsel %vm1339, %v1170, %v1338
    %v1341 = vsel %vm1329, %v1249, %v1249
    %v1342 = vsel %vm1331, %v1249, %v1341
    %v1343 = vsel %vm1333, %v1249, %v1342
    %v1344 = vsel %vm1335, %v1249, %v1343
    %v1345 = vsel %vm1337, %v1249, %v1344
    %v1346 = vsel %vm1339, %v1249, %v1345
    %v1347 = vsel %vm1329, %v1328, %v1328
    %v1348 = vsel %vm1331, %v1328, %v1347
    %v1349 = vsel %vm1333, %v1328, %v1348
    %v1350 = vsel %vm1335, %v1328, %v1349
    %v1351 = vsel %vm1337, %v1328, %v1350
    %v1352 = vsel %vm1339, %v1328, %v1351
    %v1356 = vadd.f32 %v531, %v1340
    %v1357 = vadd.f32 %v531, %v1346
    %v1358 = vadd.f32 %v531, %v1352
    %v1359 = vmul.f32 %v938, 2.0
    %v1360 = vmul.f32 %v940, 2.0
    %v1361 = vmul.f32 %v1009, 2.0
    %v1362 = vsub.f32 %v1356, %v1359
    %v1363 = vsub.f32 %v1357, %v1360
    %v1364 = vsub.f32 %v1358, %v1361
    %v1365 = vmin.f32 %v1362, %v1363
    %v1366 = vmin.f32 %v1365, %v1364
    %v1367 = vmax.f32 %v1366, 0.0
    %v1368 = vrsqrt.pop %v1367
    %v1369 = vmul.f32 %v1367, %v1368
    %vm1370 = vcmp.eq.f32.partialorder %v1367, inf
    %v1371 = vsel %vm1370, %v1367, %v1369
    %vm1372 = vcmp.eq.f32.partialorder %v1367, 0.0
    %v1373 = vand.u32 %v1367, 2147483648
    %v1374 = vsel %vm1372, %v1373, %v1371
    %1375 = vst [vmem:[#allocation2] sm:$0xff] %v1374
    // Predicated region
    $region18: #{tpu_custom_call.1} parent=1 // pred_check
      _
    $region19: #{tpu_custom_call.1} parent=1 // pred_check_branch
      %1377 = sbr.rel (0) target = $region21
    $region20: #{tpu_custom_call.1} parent=1 // pred_region
      %s1379 = ssub.s32 128, 128
      %1380 = vsyncadd [#allocation3], %s1379
      %s1382 = sshll.u32 [#allocation2], 4
      %s1383 = int_to_ptr.vmem [resolvable:$true] %s1382
      %1385 = dma.vmem_to_hbm [thread:$0]  %s1383, 128, %s4, [#allocation3]
    $region21: #{tpu_custom_call.1} parent=1 // pred_fallthru
      _
    // Predicated region
    $region22: #{tpu_custom_call.1} parent=1 // pred_check
      _
    $region23: #{tpu_custom_call.1} parent=1 // pred_check_branch
      %1387 = sbr.rel (0) target = $region25
    $region24: #{tpu_custom_call.1} parent=1 // pred_region
      %1388 = dma.done [#allocation3], 128
    $region25: #{tpu_custom_call.1} parent=1 // pred_fallthru
      _
    %1389 = vsyncpa [#allocation3], 1

</llo_original>
